<compile_context>
chip_gen: v7x
topology: tpu7x:2x2x1
jax: 0.10.0
libtpu: 0.0.40
codegen_flags: <defaults>
</compile_context>

<pallas_src>
import jax
import jax.numpy as jnp
from jax.experimental import pallas as pl
from jax.experimental.pallas import tpu as pltpu

EPS = 1e-5  # torch.nn.LayerNorm default
_HEADROOM = 4 << 20


def _round_up(v, m):
    return -(-v // m) * m


def _layernorm_f32(x_ref, gamma_ref, beta_ref):
    """Two-pass LayerNorm over the last axis in f32. Returns (normalized, raw f32 x)."""
    x = x_ref[...].astype(jnp.float32)
    mean = jnp.mean(x, axis=-1, keepdims=True)
    xc = x - mean
    var = jnp.mean(xc * xc, axis=-1, keepdims=True)      # centered (cancellation-safe)
    xn = xc * jax.lax.rsqrt(var + EPS)
    xn = xn * gamma_ref[...].astype(jnp.float32) + beta_ref[...].astype(jnp.float32)
    return xn, x


def _kernel_resident(x_ref, gamma_ref, beta_ref, w_ref, b_ref, o_ref):
    """num_n == 1: whole bf16 weight is VMEM-resident. LN -> MXU -> +skip, all live."""
    xn, x = _layernorm_f32(x_ref, gamma_ref, beta_ref)
    y = jnp.dot(xn.astype(jnp.bfloat16), w_ref[...], preferred_element_type=jnp.float32)
    y = y + b_ref[...].astype(jnp.float32)
    o_ref[...] = (y + x).astype(o_ref.dtype)             # residual uses *un-normalized* x


def _kernel_ntiled(x_ref, gamma_ref, beta_ref, w_ref, b_ref, o_ref, xn_ref):
    """num_n > 1: weight column-tiled; LN computed once per row tile and cached."""
    j = pl.program_id(1)
    tn = o_ref.shape[-1]

    @pl.when(j == 0)
    def _():
        # LayerNorm once per row tile; cache bf16 xn for the remaining column tiles and
        # feed the live value straight into the first matmul (no store->load round trip).
        xn_f32, x = _layernorm_f32(x_ref, gamma_ref, beta_ref)
        xn = xn_f32.astype(xn_ref.dtype)
        xn_ref[...] = xn
        y = jnp.dot(xn, w_ref[...], preferred_element_type=jnp.float32)
        y = y + b_ref[...].astype(jnp.float32)
        o_ref[...] = (y + x[:, :tn]).astype(o_ref.dtype)

    @pl.when(j != 0)
    def _():
        xn = xn_ref[...]
        y = jnp.dot(xn, w_ref[...], preferred_element_type=jnp.float32)
        y = y + b_ref[...].astype(jnp.float32)
        col = pl.multiple_of(j * tn, tn)
        skip = x_ref[:, pl.ds(col, tn)].astype(jnp.float32)
        o_ref[...] = (y + skip).astype(o_ref.dtype)


def _vmem_budget_bytes():
    """~85% of physical VMEM (128 MiB on v5e/v6e, 64 MiB per TensorCore on v7x)."""
    try:
        cap = int(pltpu.get_tpu_info().vmem_capacity_bytes)
    except Exception:
        cap = 64 << 20  # conservative fallback (v7x per-TensorCore VMEM)
    return int(cap * 0.85)


def _vmem_need(tm, tn, H, x_itemsize, resident):
    """VMEM bytes for one pipelined configuration."""
    n_w = 1 if resident else 2                  # weight single-buffered when grid-invariant
    scratch = 0 if resident else tm * H * 2     # bf16 xn cache (N-tiled path only)
    return (2 * tm * H * x_itemsize             # x row tile, double-buffered
            + 2 * tm * tn * x_itemsize          # output tile, double-buffered
            + n_w * H * tn * 2                  # bf16 weight tile(s)
            + scratch
            + 8 * H * 4                         # gamma / beta / bias
            + _HEADROOM)


def _pick_tiles(M, H, x_itemsize, budget, tile_m_req):
    """Choose (tile_m, tile_n). tile_n == H  <=>  weight fully resident."""
    cdiv = lambda a, b: -(-a // b)

    # Clamp the row tile to the data (decode-like small M), keep it a multiple of 16
    # (legal for both f32 and bf16). When there is enough work, keep >= 2 row tiles so
    # the "parallel" i axis can be sharded across both TensorCores (v7x megacore).
    cap = _round_up(M, 16)
    if M >= 256:
        cap = min(cap, max(128, _round_up(cdiv(M, 2), 16)))

    def fit(tm_start, tn, resident):
        tm = max(16, min(tm_start, cap))
        while tm > 16 and _vmem_need(tm, tn, H, x_itemsize, resident) > budget:
            tm = max(16, _round_up(tm // 2, 16))
        return tm if _vmem_need(tm, tn, H, x_itemsize, resident) <= budget else None

    # Preferred: whole (H, H) bf16 weight resident in VMEM -> DMA'd from HBM exactly once.
    tm = fit(tile_m_req, H, True)
    if tm is not None:
        return tm, H

    # Fallback: column-tile the weight (very large H and/or small-VMEM parts like v7x).
    # Bigger row tiles cut weight re-streaming, so start from 512 rows and shrink to fit.
    if H % 128:
        return max(16, min(tile_m_req, cap)), H  # non-128-multiple H cannot be lane-tiled
    for tn in [t for t in range(H - 128, 127, -128) if H % t == 0]:
        tm = fit(max(tile_m_req, 512), tn, False)
        if tm is not None:
            return tm, tn
    return 16, 128


def residual_connection(x, gamma, beta, w, b, *, tile_m=256, tile_n=None):
    """Fused LayerNorm -> Linear(H, H) -> + residual.

    x: (M, H); gamma/beta/b: (1, H); w: (H, H). Pass `w` already in bf16 so the MXU
    cast is not re-done (and re-streamed from HBM) on every call.
    """
    M, H = x.shape
    assert w.shape == (H, H) and gamma.shape == (1, H)
    assert beta.shape == (1, H) and b.shape == (1, H)

    w_bf16 = w if w.dtype == jnp.bfloat16 else w.astype(jnp.bfloat16)

    budget = _vmem_budget_bytes()
    if tile_n is None:
        tile_m, tile_n = _pick_tiles(M, H, x.dtype.itemsize, budget, tile_m)
    else:
        assert tile_n == H or (H % tile_n == 0 and tile_n % 128 == 0)
        tile_m = max(16, min(tile_m, _round_up(M, 16)))
    assert tile_m % 16 == 0

    num_m = -(-M // tile_m)          # ragged last row tile is masked by Pallas (no jnp.pad)
    resident = tile_n == H
    const = pl.Buffered(1)           # grid-invariant operands: one buffer, one HBM read

    est = _vmem_need(tile_m, tile_n, H, x.dtype.itemsize, resident)
    vmem_limit = int(min(budget, max(est, 32 << 20)))

    if resident:
        grid_spec = pltpu.PrefetchScalarGridSpec(
            num_scalar_prefetch=0,
            grid=(num_m,),
            in_specs=[
                pl.BlockSpec((tile_m, H), lambda i: (i, 0)),                     # x rows
                pl.BlockSpec((1, H), lambda i: (0, 0), pipeline_mode=const),     # gamma
                pl.BlockSpec((1, H), lambda i: (0, 0), pipeline_mode=const),     # beta
                pl.BlockSpec((H, H), lambda i: (0, 0), pipeline_mode=const),     # weight
                pl.BlockSpec((1, H), lambda i: (0, 0), pipeline_mode=const),     # bias
            ],
            out_specs=pl.BlockSpec((tile_m, H), lambda i: (i, 0)),
        )
        kernel = _kernel_resident
        semantics = ("parallel",)
    else:
        num_n = H // tile_n
        grid_spec = pltpu.PrefetchScalarGridSpec(
            num_scalar_prefetch=0,
            grid=(num_m, num_n),
            in_specs=[
                pl.BlockSpec((tile_m, H), lambda i, j: (i, 0)),                  # x rows
                pl.BlockSpec((1, H), lambda i, j: (0, 0), pipeline_mode=const),  # gamma
                pl.BlockSpec((1, H), lambda i, j: (0, 0), pipeline_mode=const),  # beta
                pl.BlockSpec((H, tile_n), lambda i, j: (0, j)),                  # weight cols
                pl.BlockSpec((1, tile_n), lambda i, j: (0, j)),                  # bias cols
            ],
            out_specs=pl.BlockSpec((tile_m, tile_n), lambda i, j: (i, j)),
            scratch_shapes=[pltpu.VMEM((tile_m, H), jnp.bfloat16)],  # cached normalized x
        )
        kernel = _kernel_ntiled
        # j must stay in-order on a single core (xn cache); only i is megacore-parallel.
        semantics = ("parallel", "arbitrary")

    return pl.pallas_call(
        kernel,
        out_shape=jax.ShapeDtypeStruct((M, H), x.dtype),
        grid_spec=grid_spec,
        compiler_params=pltpu.CompilerParams(
            dimension_semantics=semantics,
            vmem_limit_bytes=vmem_limit,
        ),
    )(x, gamma, beta, w_bf16, b)


def _reference(x, gamma, beta, w, b):
    """Matches the kernel's precision policy: f32 two-pass LN, bf16 MXU, f32 accum."""
    xf = x.astype(jnp.float32)
    mean = jnp.mean(xf, axis=-1, keepdims=True)
    xc = xf - mean
    var = jnp.mean(xc * xc, axis=-1, keepdims=True)
    xn = xc * jax.lax.rsqrt(var + EPS) * gamma + beta
    y = jnp.dot(xn.astype(jnp.bfloat16), w.astype(jnp.bfloat16),
                preferred_element_type=jnp.float32) + b
    return (y + xf).astype(x.dtype)


if __name__ == "__main__":
    key = jax.random.PRNGKey(0)
    keys = jax.random.split(key, 8)

    # --- Test 1: module's natural small shape; exercises the resident-weight kernel ---
    batch, seq, hidden = 2, 8, 128
    x = jax.random.normal(keys[0], (batch, seq, hidden), dtype=jnp.float32)
    x2d = x.reshape(batch * seq, hidden)
    gamma = jnp.ones((1, hidden), dtype=jnp.float32)    # PyTorch LayerNorm default init
    beta = jnp.zeros((1, hidden), dtype=jnp.float32)
    # TODO(synk): PyTorch passes `sublayer` as an arbitrary callable; it is instantiated
    # here as a dense hidden->hidden projection so it can be fused in-kernel.
    w = jax.random.normal(keys[1], (hidden, hidden), dtype=jnp.float32) * 0.02
    b = jax.random.normal(keys[2], (1, hidden), dtype=jnp.float32) * 0.02
    w_bf16 = w.astype(jnp.bfloat16)                     # hoisted: cast once, not per call

    out = jax.block_until_ready(residual_connection(x2d, gamma, beta, w_bf16, b))
    ref = _reference(x2d, gamma, beta, w, b)
    assert out.shape == (batch * seq, hidden)
    assert jnp.allclose(out, ref, atol=2e-3, rtol=2e-3), "mismatch (resident path)"
    _ = out.reshape(batch, seq, hidden)                 # same semantics as the module

    # --- Test 2: forced N-tiled weight path + ragged (non-multiple-of-tile) row count ---
    M2, hidden2 = 40, 256
    x2 = jax.random.normal(keys[3], (M2, hidden2), dtype=jnp.float32) * 3.0 + 1.5
    gamma2 = 1.0 + 0.1 * jax.random.normal(keys[4], (1, hidden2), dtype=jnp.float32)
    beta2 = 0.1 * jax.random.normal(keys[5], (1, hidden2), dtype=jnp.float32)
    w2 = jax.random.normal(keys[6], (hidden2, hidden2), dtype=jnp.float32) * 0.02
    b2 = jax.random.normal(keys[7], (1, hidden2), dtype=jnp.float32) * 0.02
    out2 = jax.block_until_ready(
        residual_connection(x2, gamma2, beta2, w2.astype(jnp.bfloat16), b2, tile_n=128))
    ref2 = _reference(x2, gamma2, beta2, w2, b2)
    assert out2.shape == (M2, hidden2)
    assert jnp.allclose(out2, ref2, atol=2e-3, rtol=2e-3), "mismatch (N-tiled path)"

    print("KERNEL_OK")
</pallas_src>

<mosaic_0001>
module attributes {stable_mosaic.version = 11 : i64} {
  func.func @_kernel_resident(%arg0: i32, %arg1: memref<16x128xf32, #tpu.memory_space<vmem>>, %arg2: memref<1x128xf32, #tpu.memory_space<vmem>>, %arg3: memref<1x128xf32, #tpu.memory_space<vmem>>, %arg4: memref<128x128xbf16, #tpu.memory_space<vmem>>, %arg5: memref<1x128xf32, #tpu.memory_space<vmem>>, %arg6: memref<16x128xf32, #tpu.memory_space<vmem>>) attributes {dimension_semantics = [#tpu.dimension_semantics<parallel>], iteration_bounds = array<i64: 1>, scalar_prefetch = 0 : i64, scratch_operands = 0 : i64, tpu.core_type = #tpu.core_type<tc>, window_params = [{transform_indices = @transform_0, window_bounds = array<i64: 16, 128>}, {pipeline_mode = #tpu.pipeline_mode<synchronous>, transform_indices = @transform_1, window_bounds = array<i64: 1, 128>}, {pipeline_mode = #tpu.pipeline_mode<synchronous>, transform_indices = @transform_2, window_bounds = array<i64: 1, 128>}, {pipeline_mode = #tpu.pipeline_mode<synchronous>, transform_indices = @transform_3, window_bounds = array<i64: 128, 128>}, {pipeline_mode = #tpu.pipeline_mode<synchronous>, transform_indices = @transform_4, window_bounds = array<i64: 1, 128>}, {transform_indices = @transform_5, window_bounds = array<i64: 16, 128>}]} {
    %c0 = arith.constant 0 : index
    %c0_0 = arith.constant 0 : index
    %0 = vector.load %arg1[%c0, %c0_0] : memref<16x128xf32, #tpu.memory_space<vmem>>, vector<16x128xf32>
    %cst = arith.constant dense<0.000000e+00> : vector<16xf32>
    %1 = vector.multi_reduction <add>, %0, %cst [1] : vector<16x128xf32> to vector<16xf32>
    %2 = vector.shape_cast %1 : vector<16xf32> to vector<16x1xf32>
    %cst_1 = arith.constant 1.280000e+02 : f32
    %3 = vector.broadcast %cst_1 : f32 to vector<16x1xf32>
    %4 = arith.divf %2, %3 : vector<16x1xf32>
    %5 = vector.broadcast %4 : vector<16x1xf32> to vector<16x128xf32>
    %6 = arith.subf %0, %5 : vector<16x128xf32>
    %7 = arith.mulf %6, %6 : vector<16x128xf32>
    %cst_2 = arith.constant dense<0.000000e+00> : vector<16xf32>
    %8 = vector.multi_reduction <add>, %7, %cst_2 [1] : vector<16x128xf32> to vector<16xf32>
    %9 = vector.shape_cast %8 : vector<16xf32> to vector<16x1xf32>
    %cst_3 = arith.constant 1.280000e+02 : f32
    %10 = vector.broadcast %cst_3 : f32 to vector<16x1xf32>
    %11 = arith.divf %9, %10 : vector<16x1xf32>
    %cst_4 = arith.constant 9.99999974E-6 : f32
    %12 = vector.broadcast %cst_4 : f32 to vector<16x1xf32>
    %13 = arith.addf %11, %12 : vector<16x1xf32>
    %14 = math.rsqrt %13 : vector<16x1xf32>
    %15 = vector.broadcast %14 : vector<16x1xf32> to vector<16x128xf32>
    %16 = arith.mulf %6, %15 : vector<16x128xf32>
    %c0_5 = arith.constant 0 : index
    %c0_6 = arith.constant 0 : index
    %17 = vector.load %arg2[%c0_5, %c0_6] : memref<1x128xf32, #tpu.memory_space<vmem>>, vector<1x128xf32>
    %18 = vector.broadcast %17 : vector<1x128xf32> to vector<16x128xf32>
    %19 = arith.mulf %16, %18 : vector<16x128xf32>
    %c0_7 = arith.constant 0 : index
    %c0_8 = arith.constant 0 : index
    %20 = vector.load %arg3[%c0_7, %c0_8] : memref<1x128xf32, #tpu.memory_space<vmem>>, vector<1x128xf32>
    %21 = vector.broadcast %20 : vector<1x128xf32> to vector<16x128xf32>
    %22 = arith.addf %19, %21 : vector<16x128xf32>
    %23 = arith.truncf %22 : vector<16x128xf32> to vector<16x128xbf16>
    %c0_9 = arith.constant 0 : index
    %c0_10 = arith.constant 0 : index
    %24 = vector.load %arg4[%c0_9, %c0_10] : memref<128x128xbf16, #tpu.memory_space<vmem>>, vector<128x128xbf16>
    %cst_11 = arith.constant dense<0.000000e+00> : vector<16x128xf32>
    %25 = tpu.matmul %23, %24, %cst_11 {dimension_numbers = #tpu.dot_dimension_numbers<[1], [0], [0], [1], [0, 0, 1, 1], [], []>} : vector<16x128xbf16>, vector<128x128xbf16>, vector<16x128xf32> -> vector<16x128xf32>
    %c0_12 = arith.constant 0 : index
    %c0_13 = arith.constant 0 : index
    %26 = vector.load %arg5[%c0_12, %c0_13] : memref<1x128xf32, #tpu.memory_space<vmem>>, vector<1x128xf32>
    %27 = vector.broadcast %26 : vector<1x128xf32> to vector<16x128xf32>
    %28 = arith.addf %25, %27 : vector<16x128xf32>
    %29 = arith.addf %28, %0 : vector<16x128xf32>
    %c0_14 = arith.constant 0 : index
    %c0_15 = arith.constant 0 : index
    %30 = vector.load %arg6[%c0_14, %c0_15] : memref<16x128xf32, #tpu.memory_space<vmem>>, vector<16x128xf32>
    tpu.vector_store %arg6[%c0_14, %c0_15], %29 {strides = array<i32>} : memref<16x128xf32, #tpu.memory_space<vmem>>, vector<16x128xf32>,
    return
  }
  func.func @transform_0(%arg0: i32) -> (i32, i32) {
    %c0_i32 = arith.constant 0 : i32
    %c0_i32_0 = arith.constant 0 : i32
    return %arg0, %c0_i32 : i32, i32
  }
  func.func @transform_1(%arg0: i32) -> (i32, i32) {
    %c0_i32 = arith.constant 0 : i32
    %c0_i32_0 = arith.constant 0 : i32
    %c0_i32_1 = arith.constant 0 : i32
    return %c0_i32, %c0_i32_0 : i32, i32
  }
  func.func @transform_2(%arg0: i32) -> (i32, i32) {
    %c0_i32 = arith.constant 0 : i32
    %c0_i32_0 = arith.constant 0 : i32
    %c0_i32_1 = arith.constant 0 : i32
    return %c0_i32, %c0_i32_0 : i32, i32
  }
  func.func @transform_3(%arg0: i32) -> (i32, i32) {
    %c0_i32 = arith.constant 0 : i32
    %c0_i32_0 = arith.constant 0 : i32
    %c0_i32_1 = arith.constant 0 : i32
    return %c0_i32, %c0_i32_0 : i32, i32
  }
  func.func @transform_4(%arg0: i32) -> (i32, i32) {
    %c0_i32 = arith.constant 0 : i32
    %c0_i32_0 = arith.constant 0 : i32
    %c0_i32_1 = arith.constant 0 : i32
    return %c0_i32, %c0_i32_0 : i32, i32
  }
  func.func @transform_5(%arg0: i32) -> (i32, i32) {
    %c0_i32 = arith.constant 0 : i32
    %c0_i32_0 = arith.constant 0 : i32
    return %arg0, %c0_i32 : i32, i32
  }
}

</mosaic_0001>

<llo_original>
// kernel: tpu_custom_call.1
$region0: #{tpu_custom_call.1}
  #allocation0 [shape = 'u32[]', space=smem, size = 0x4, offset = 0x4, fixed_abs, tag = 'smem constant byte address 0x4 - core index']
  #allocation1 [shape = 'u32[144,128]{1,0:T(1,128)}', space=vmem, size = 0x12000, scoped, tag = 'internal scratch']
  %s0 = inlined_call_operand.hbm [shape: f32[16,128], index: 0, kind: input, shape index: {}]
  %s1 = inlined_call_operand.vmem [shape: f32[1,128], index: 1, kind: input, shape index: {}]
  %s2 = inlined_call_operand.vmem [shape: f32[1,128], index: 2, kind: input, shape index: {}]
  %s3 = inlined_call_operand.hbm [shape: bf16[128,128], index: 3, kind: input, shape index: {}]
  %s4 = inlined_call_operand.vmem [shape: f32[1,128], index: 4, kind: input, shape index: {}]
  %s5 = inlined_call_operand.hbm [shape: f32[16,128], index: 5, kind: output, shape index: {}]
  %s6 = sld [smem:[#allocation0]]
  $region38: #{tpu_custom_call.1} parent=0
    _
  %s8 = ssub.s32 1, %s6
  %s9 = scalar_select 0, %s8, %s6
  $region1: #{tpu_custom_call.1} parent=0
    #allocation2 [shape = 'u8[8192]{0}', space=vmem, size = 0x2000, scoped, tag = 'input window, operand 0, single buffered']
    #allocation3 [shape = 's32[1]{0}', space=sflag, size = 0x4, scoped, tag = 'scoped memory for tpu_custom_call.1']
    #allocation4 [shape = 's32[1]{0}', space=sflag, size = 0x4, scoped, tag = 'scoped memory for tpu_custom_call.1']
    #allocation5 [shape = 'u8[32768]{0}', space=vmem, size = 0x8000, scoped, tag = 'input window, operand 3, single buffered']
    #allocation6 [shape = 's32[1]{0}', space=sflag, size = 0x4, scoped, tag = 'scoped memory for tpu_custom_call.1']
    #allocation7 [shape = 'u8[8192]{0}', space=vmem, size = 0x2000, scoped, tag = 'output window, operand 0, single buffered']
    %10 = vsyncpa [#allocation3], 0
    %11 = vsyncpa [#allocation6], 0
    %12 = vsyncpa [#allocation4], 0
    // Predicated region
    $region2: #{tpu_custom_call.1} parent=1 // pred_check
      _
    $region3: #{tpu_custom_call.1} parent=1 // pred_check_branch
      %14 = sbr.rel (0) target = $region5
    $region4: #{tpu_custom_call.1} parent=1 // pred_region
      %s16 = ssub.s32 256, 256
      %17 = vsyncadd [#allocation3], %s16
      %s18 = sshll.u32 [#allocation2], 4
      %s19 = int_to_ptr.vmem [resolvable:$true] %s18
      %24 = dma.hbm_to_vmem [thread:$0]  %s0, 256, %s19, [#allocation3], 128, 128, 8
    $region5: #{tpu_custom_call.1} parent=1 // pred_fallthru
      _
    // Predicated region
    $region6: #{tpu_custom_call.1} parent=1 // pred_check
      _
    $region7: #{tpu_custom_call.1} parent=1 // pred_check_branch
      %26 = sbr.rel (0) target = $region9
    $region8: #{tpu_custom_call.1} parent=1 // pred_region
      _
    $region9: #{tpu_custom_call.1} parent=1 // pred_fallthru
      _
    // Predicated region
    $region10: #{tpu_custom_call.1} parent=1 // pred_check
      _
    $region11: #{tpu_custom_call.1} parent=1 // pred_check_branch
      %28 = sbr.rel (0) target = $region13
    $region12: #{tpu_custom_call.1} parent=1 // pred_region
      _
    $region13: #{tpu_custom_call.1} parent=1 // pred_fallthru
      _
    // Predicated region
    $region14: #{tpu_custom_call.1} parent=1 // pred_check
      _
    $region15: #{tpu_custom_call.1} parent=1 // pred_check_branch
      %30 = sbr.rel (0) target = $region17
    $region16: #{tpu_custom_call.1} parent=1 // pred_region
      %s32 = ssub.s32 1024, 1024
      %33 = vsyncadd [#allocation6], %s32
      %s34 = sshll.u32 [#allocation5], 4
      %s35 = int_to_ptr.vmem [resolvable:$true] %s34
      %40 = dma.hbm_to_vmem [thread:$0]  %s3, 1024, %s35, [#allocation6], 64, 64, 4
    $region17: #{tpu_custom_call.1} parent=1 // pred_fallthru
      _
    // Predicated region
    $region18: #{tpu_custom_call.1} parent=1 // pred_check
      _
    $region19: #{tpu_custom_call.1} parent=1 // pred_check_branch
      %42 = sbr.rel (0) target = $region21
    $region20: #{tpu_custom_call.1} parent=1 // pred_region
      _
    $region21: #{tpu_custom_call.1} parent=1 // pred_fallthru
      _
    // Predicated region
    $region22: #{tpu_custom_call.1} parent=1 // pred_check
      _
    $region23: #{tpu_custom_call.1} parent=1 // pred_check_branch
      %44 = sbr.rel (0) target = $region25
    $region24: #{tpu_custom_call.1} parent=1 // pred_region
      %45 = dma.done [#allocation3], 256
    $region25: #{tpu_custom_call.1} parent=1 // pred_fallthru
      _
    // Predicated region
    $region26: #{tpu_custom_call.1} parent=1 // pred_check
      _
    $region27: #{tpu_custom_call.1} parent=1 // pred_check_branch
      %47 = sbr.rel (0) target = $region29
    $region28: #{tpu_custom_call.1} parent=1 // pred_region
      %48 = dma.done [#allocation6], 1024
    $region29: #{tpu_custom_call.1} parent=1 // pred_fallthru
      _
    %v50 = vld [vmem:[#allocation2] sm:$0xff]
    %v51 = vld [vmem:[#allocation2 + $0x8] sm:$0xff]
    %52 = vadd.xlane.f32.xlu0 %v50
    %v53 = vpop.xlane.xlu0 %52
    %54 = vadd.xlane.f32.xlu0 %v51
    %v55 = vpop.xlane.xlu0 %54
    %v56 = vrcp.pop 128.0
    %v57 = vmul.f32 %v53, %v56
    %v58 = vmul.f32 %v55, %v56
    %v59 = vsub.f32 %v50, %v57
    %v60 = vsub.f32 %v51, %v58
    %v61 = vmul.f32 %v59, %v59
    %v62 = vmul.f32 %v60, %v60
    %63 = vadd.xlane.f32.xlu0 %v61
    %v64 = vpop.xlane.xlu0 %63
    %65 = vadd.xlane.f32.xlu0 %v62
    %v66 = vpop.xlane.xlu0 %65
    %v67 = vmul.f32 %v64, %v56
    %v68 = vmul.f32 %v66, %v56
    %v69 = vadd.f32 %v67, 1e-05
    %v70 = vadd.f32 %v68, 1e-05
    %v71 = vrsqrt.pop %v69
    %v72 = vrsqrt.pop %v70
    %v73 = vmul.f32 %v59, %v71
    %v74 = vmul.f32 %v60, %v72
    %v75 = vld [vmem:[%s1] sm:$0x1]
    %v77 = vlaneseq
    %v78 = vshrl.u32 %v77, 7
    %v79 = vsub.s32 0, %v78
    %v80 = vrot.slane %v75, %v79
    %v82 = vmul.f32 %v73, %v80
    %v83 = vmul.f32 %v74, %v80
    %v84 = vld [vmem:[%s2] sm:$0x1]
    %v86 = vlaneseq
    %v87 = vshrl.u32 %v86, 7
    %v88 = vsub.s32 0, %v87
    %v89 = vrot.slane %v84, %v88
    %v91 = vadd.f32 %v82, %v89
    %v92 = vadd.f32 %v83, %v89
    %v93 = vpack.c.bf16 %v92, %v91
    %v94 = vld [vmem:[#allocation5] sm:$0xf]
    %v95 = vld [vmem:[#allocation5 + $0x4] sm:$0xf]
    %v96 = vld [vmem:[#allocation5 + $0x8] sm:$0xf]
    %v97 = vld [vmem:[#allocation5 + $0xc] sm:$0xf]
    %v98 = vld [vmem:[#allocation5 + $0x10] sm:$0xf]
    %v99 = vld [vmem:[#allocation5 + $0x14] sm:$0xf]
    %v100 = vld [vmem:[#allocation5 + $0x18] sm:$0xf]
    %v101 = vld [vmem:[#allocation5 + $0x1c] sm:$0xf]
    %v102 = vld [vmem:[#allocation5 + $0x20] sm:$0xf]
    %v103 = vld [vmem:[#allocation5 + $0x24] sm:$0xf]
    %v104 = vld [vmem:[#allocation5 + $0x28] sm:$0xf]
    %v105 = vld [vmem:[#allocation5 + $0x2c] sm:$0xf]
    %v106 = vld [vmem:[#allocation5 + $0x30] sm:$0xf]
    %v107 = vld [vmem:[#allocation5 + $0x34] sm:$0xf]
    %v108 = vld [vmem:[#allocation5 + $0x38] sm:$0xf]
    %v109 = vld [vmem:[#allocation5 + $0x3c] sm:$0xf]
    %v110 = vld [vmem:[%s4] sm:$0x1]
    %v112 = vlaneseq
    %v113 = vshrl.u32 %v112, 7
    %v114 = vsub.s32 0, %v113
    %v115 = vrot.slane %v110, %v114
    %v133 = vunpack.c.l.b16 %v94
    %v134 = vunpack.c.l.b16 %v95
    %v135 = vunpack.c.l.b16 %v96
    %v136 = vunpack.c.l.b16 %v97
    %v137 = vunpack.c.l.b16 %v98
    %v138 = vunpack.c.l.b16 %v99
    %v139 = vunpack.c.l.b16 %v100
    %v140 = vunpack.c.l.b16 %v101
    %v141 = vunpack.c.l.b16 %v102
    %v142 = vunpack.c.l.b16 %v103
    %v143 = vunpack.c.l.b16 %v104
    %v144 = vunpack.c.l.b16 %v105
    %v145 = vunpack.c.l.b16 %v106
    %v146 = vunpack.c.l.b16 %v107
    %v147 = vunpack.c.l.b16 %v108
    %v148 = vunpack.c.l.b16 %v109
    %v149 = vpack.c.b16 %v134, %v133
    %v150 = vpack.c.b16 %v136, %v135
    %v151 = vpack.c.b16 %v138, %v137
    %v152 = vpack.c.b16 %v140, %v139
    %v153 = vpack.c.b16 %v142, %v141
    %v154 = vpack.c.b16 %v144, %v143
    %v155 = vpack.c.b16 %v146, %v145
    %v156 = vpack.c.b16 %v148, %v147
    %165 = vmatprep.subr.bf16.mxu0 0
    %166 = vmatpush1.bf16.msra.mxu0 %v149
    %167 = vmatprep.subr.bf16.mxu0 0
    %168 = vmatpush1.bf16.msra.mxu0 %v150
    %169 = vmatprep.subr.bf16.mxu0 0
    %170 = vmatpush1.bf16.msra.mxu0 %v151
    %171 = vmatprep.subr.bf16.mxu0 0
    %172 = vmatpush1.bf16.msra.mxu0 %v152
    %173 = vmatprep.subr.bf16.mxu0 0
    %174 = vmatpush1.bf16.msra.mxu0 %v153
    %175 = vmatprep.subr.bf16.mxu0 0
    %176 = vmatpush1.bf16.msra.mxu0 %v154
    %177 = vmatprep.subr.bf16.mxu0 0
    %178 = vmatpush1.bf16.msra.mxu0 %v155
    %179 = vmatprep.subr.bf16.mxu0 0
    %180 = vmatpush1.bf16.msra.mxu0 %v156
    %181 = vmatprep.subr.bf16.mxu0 0
    %182 = vmatpush1.bf16.msra.mxu0 0
    %183 = vmatprep.subr.bf16.mxu0 0
    %184 = vmatpush1.bf16.msra.mxu0 0
    %185 = vmatprep.subr.bf16.mxu0 0
    %186 = vmatpush1.bf16.msra.mxu0 0
    %187 = vmatprep.subr.bf16.mxu0 0
    %188 = vmatpush1.bf16.msra.mxu0 0
    %189 = vmatprep.subr.bf16.mxu0 0
    %190 = vmatpush1.bf16.msra.mxu0 0
    %191 = vmatprep.subr.bf16.mxu0 0
    %192 = vmatpush1.bf16.msra.mxu0 0
    %193 = vmatprep.subr.bf16.mxu0 0
    %194 = vmatpush1.bf16.msra.mxu0 0
    %195 = vmatprep.subr.bf16.mxu0 0
    %196 = vmatpush1.bf16.msra.mxu0 0
    %197 = vmatprep.mubr.bf16.mxu0 0
    %198 = vmatmul.mubr.bf16.gmra.mrb[0].mxu0 %v93
    %v199 = vpop.f32.mrb[0].mxu0
    %v200 = vadd.f32 %v115, %v199
    %v201 = vpop.f32.mrb[0].mxu0
    %v202 = vpop.f32.mrb[0].mxu0
    %v203 = vadd.f32 %v115, %v202
    %v204 = vpop.f32.mrb[0].mxu0
    %205 = vdwg.mxu0
    %v206 = vadd.f32 %v200, %v50
    %v207 = vadd.f32 %v203, %v51
    %208 = vst [vmem:[#allocation7] sm:$0xff] %v206
    %209 = vst [vmem:[#allocation7 + $0x8] sm:$0xff] %v207
    // Predicated region
    $region30: #{tpu_custom_call.1} parent=1 // pred_check
      _
    $region31: #{tpu_custom_call.1} parent=1 // pred_check_branch
      %211 = sbr.rel (0) target = $region33
    $region32: #{tpu_custom_call.1} parent=1 // pred_region
      %s213 = ssub.s32 256, 256
      %214 = vsyncadd [#allocation4], %s213
      %s215 = sshll.u32 [#allocation7], 4
      %s216 = int_to_ptr.vmem [resolvable:$true] %s215
      %221 = dma.vmem_to_hbm [thread:$0]  %s216, 256, %s5, [#allocation4], 128, 128, 8
    $region33: #{tpu_custom_call.1} parent=1 // pred_fallthru
      _
    // Predicated region
    $region34: #{tpu_custom_call.1} parent=1 // pred_check
      _
    $region35: #{tpu_custom_call.1} parent=1 // pred_check_branch
      %223 = sbr.rel (0) target = $region37
    $region36: #{tpu_custom_call.1} parent=1 // pred_region
      %224 = dma.done [#allocation4], 256
    $region37: #{tpu_custom_call.1} parent=1 // pred_fallthru
      _
    %225 = vsyncpa [#allocation3], 1
    %226 = vsyncpa [#allocation6], 1
    %227 = vsyncpa [#allocation4], 1

</llo_original>
